<compile_context>
chip_gen: v7x
topology: tpu7x:2x2x1
jax: 0.10.0
libtpu: 0.0.40
codegen_flags: <defaults>
</compile_context>

<pallas_src>
import functools

import jax
import jax.numpy as jnp
from jax.experimental import pallas as pl
from jax.experimental.pallas import tpu as pltpu


def _round_up(x: int, m: int) -> int:
    return ((x + m - 1) // m) * m


def _chip_config():
    """Generation-aware tile caps: (tm_cap, tn_cap, tk_cap, vmem_limit)."""
    # Conservative (v7x-safe: 64 MiB physical VMEM per TC) defaults.
    tm_cap, tn_cap, tk_cap, vmem_limit = 512, 256, 512, 32 << 20
    try:
        vmem = int(pltpu.get_tpu_info().vmem_capacity_bytes)
        if vmem >= (96 << 20):  # v5e / v6e: 128 MiB physical VMEM
            tm_cap, tn_cap, tk_cap, vmem_limit = 1024, 256, 1024, 64 << 20
    except Exception:
        pass  # fall back to the conservative caps (safe on every generation)
    return tm_cap, tn_cap, tk_cap, vmem_limit


def _encode_kernel(x_ref, w_ref, b_ref, o_ref, *, mxu_dtype):
    # grid = (batch_tile, latent_tile, feature_tile) -- reduction axis LAST.
    k = pl.program_id(2)

    @pl.when(k == 0)
    def _init():
        # Bias applied exactly once, in f32 (bias is kept f32 end-to-end so
        # bf16 activations still match the reference linear layer's bias).
        o_ref[...] = jnp.broadcast_to(b_ref[...], o_ref.shape)

    # bf16 MXU operands (in-kernel cast: no extra HBM pass for f32 inputs),
    # f32 accumulation directly into the resident f32 output block.
    o_ref[...] += jnp.dot(
        x_ref[...].astype(mxu_dtype),
        w_ref[...].astype(mxu_dtype),
        preferred_element_type=jnp.float32,
    )


def encode_view(x, w, b, *, mxu_dtype=jnp.bfloat16):
    """One view's linear encoder:  (N, D) @ (D, K) + (K,) -> (N, K).

    Tiled Pallas matmul; returns latents in x.dtype.
    """
    n, d = int(x.shape[0]), int(x.shape[1])
    d_w, latent = int(w.shape[0]), int(w.shape[1])
    assert d == d_w and b.shape == (latent,)

    tm_cap, tn_cap, tk_cap, vmem_limit = _chip_config()

    # Sublane multiple for the batch axis (16 if the HBM-side X is packed).
    sub = 16 if jnp.dtype(x.dtype).itemsize < 4 else 8

    # Batch tiling: full-dim block when it fits (little/no padding),
    # otherwise tile with a sublane-aligned cap.
    if n <= tm_cap:
        n_pad = _round_up(n, sub)
        tm = n_pad
    else:
        tm = _round_up(tm_cap, sub)
        n_pad = _round_up(n, tm)

    # Feature (reduction) tiling: full-dim block when small => single K step
    # and essentially no zero-padding; only large D gets tiled (+ small pad).
    if d <= tk_cap:
        d_pad = _round_up(d, 8)
        tk = d_pad
    else:
        tk = tk_cap
        d_pad = _round_up(d, tk)

    # Latent axis lane-padded to a multiple of 128 => unmasked output stores.
    tn = min(tn_cap, _round_up(latent, 128))
    k_pad = _round_up(latent, tn)

    x_in = x
    if (n_pad, d_pad) != (n, d):
        x_in = jnp.pad(x, ((0, n_pad - n), (0, d_pad - d)))
    # Weights are tiny: pad + pre-cast to the MXU dtype once (halves the
    # weight DMA that repeats per batch tile).  Bias stays f32.
    w_in = jnp.pad(w.astype(mxu_dtype), ((0, d_pad - d), (0, k_pad - latent)))
    b_in = jnp.pad(
        b.astype(jnp.float32).reshape(1, latent), ((0, 0), (0, k_pad - latent))
    )

    grid = (n_pad // tm, k_pad // tn, d_pad // tk)

    bytes_accessed = int(
        x_in.size * x_in.dtype.itemsize
        + w_in.size * w_in.dtype.itemsize
        + b_in.size * 4
        + n_pad * k_pad * 4
    )

    out = pl.pallas_call(
        functools.partial(_encode_kernel, mxu_dtype=mxu_dtype),
        out_shape=jax.ShapeDtypeStruct((n_pad, k_pad), jnp.float32),
        grid_spec=pltpu.PrefetchScalarGridSpec(
            num_scalar_prefetch=0,
            grid=grid,
            in_specs=[
                pl.BlockSpec((tm, tk), lambda i, j, k: (i, k)),
                pl.BlockSpec((tk, tn), lambda i, j, k: (k, j)),
                pl.BlockSpec((1, tn), lambda i, j, k: (0, j)),
            ],
            out_specs=pl.BlockSpec((tm, tn), lambda i, j, k: (i, j)),
        ),
        compiler_params=pltpu.CompilerParams(
            # Leading (batch) axis is the balanced parallel axis for the
            # v7x megacore; reduction axis is last and "arbitrary".
            dimension_semantics=("parallel", "parallel", "arbitrary"),
            vmem_limit_bytes=vmem_limit,
        ),
        cost_estimate=pl.CostEstimate(
            flops=2 * n_pad * d_pad * k_pad,
            transcendentals=0,
            bytes_accessed=bytes_accessed,
        ),
    )(x_in, w_in, b_in)

    return out[:n, :latent].astype(x.dtype)


class DCCABasePallas:
    """JAX/Pallas counterpart of cca_zoo _DCCA_base."""

    def __init__(self, latent_dims: int, view_feature_dims, key):
        self.latent_dims = latent_dims
        self.schedulers = [None]
        # Deterministic synthetic parameters (one linear encoder per view).
        self.params = []
        for i, d in enumerate(view_feature_dims):
            kw, kb = jax.random.split(jax.random.fold_in(key, i))
            w = (
                jax.random.normal(kw, (d, latent_dims), jnp.float32)
                / jnp.sqrt(jnp.float32(d))
            )
            bias = jax.random.normal(kb, (latent_dims,), jnp.float32) * 0.01
            self.params.append((w, bias))

    # TODO(synk): `forward`/`update_weights` are @abstractmethod in the base
    # class; forward is realized here as the canonical per-view linear encoder
    # to latent_dims (what DCCA subclasses do), one Pallas matmul per view.
    def forward(self, *views):
        assert len(views) == len(self.params)
        return tuple(
            encode_view(x, w, b) for x, (w, b) in zip(views, self.params)
        )

    def update_weights(self, *args):
        raise NotImplementedError("abstract in _DCCA_base")

    def post_transform(self, *z_list, train=False):
        # Exact base-class semantics: identity over the latent list.
        return z_list


if __name__ == "__main__":
    key = jax.random.PRNGKey(0)
    k_x1, k_x2, k_params = jax.random.split(key, 3)

    latent_dims = 4
    batch = 8
    feat1, feat2 = 32, 24

    x1 = jax.random.normal(k_x1, (batch, feat1), jnp.float32)
    x2 = jax.random.normal(k_x2, (batch, feat2), jnp.float32)

    model = DCCABasePallas(latent_dims, (feat1, feat2), k_params)

    z_list = model.forward(x1, x2)
    z_list = model.post_transform(*z_list, train=False)
    z_list = jax.block_until_ready(z_list)

    # Sanity check against a plain-JAX reference with the same bf16 MXU
    # operand quantization and f32 accumulation / f32 bias.
    for z, x, (w, bias) in zip(z_list, (x1, x2), model.params):
        ref = (
            jnp.dot(
                x.astype(jnp.bfloat16),
                w.astype(jnp.bfloat16),
                preferred_element_type=jnp.float32,
            )
            + bias
        )
        assert z.shape == (batch, latent_dims)
        assert jnp.allclose(z.astype(jnp.float32), ref, atol=1e-4, rtol=1e-4), (
            float(jnp.max(jnp.abs(z.astype(jnp.float32) - ref)))
        )

    print("KERNEL_OK")
</pallas_src>

<mosaic_0001>
module attributes {stable_mosaic.version = 11 : i64} {
  func.func @_encode_kernel(%arg0: i32, %arg1: i32, %arg2: i32, %arg3: memref<8x32xf32, #tpu.memory_space<vmem>>, %arg4: memref<32x128xbf16, #tpu.memory_space<vmem>>, %arg5: memref<1x128xf32, #tpu.memory_space<vmem>>, %arg6: memref<8x128xf32, #tpu.memory_space<vmem>>) attributes {dimension_semantics = [#tpu.dimension_semantics<parallel>, #tpu.dimension_semantics<parallel>, #tpu.dimension_semantics<arbitrary>], iteration_bounds = array<i64: 1, 1, 1>, scalar_prefetch = 0 : i64, scratch_operands = 0 : i64, tpu.core_type = #tpu.core_type<tc>, window_params = [{transform_indices = @transform_0, window_bounds = array<i64: 8, 32>}, {transform_indices = @transform_1, window_bounds = array<i64: 32, 128>}, {transform_indices = @transform_2, window_bounds = array<i64: 1, 128>}, {transform_indices = @transform_3, window_bounds = array<i64: 8, 128>}]} {
    %c0_i32 = arith.constant 0 : i32
    %0 = arith.cmpi eq, %arg2, %c0_i32 : i32
    %1 = arith.extui %0 : i1 to i32
    %c0_i32_0 = arith.constant 0 : i32
    %2 = arith.cmpi ne, %1, %c0_i32_0 : i32
    scf.if %2 {
      %c0_8 = arith.constant 0 : index
      %c0_9 = arith.constant 0 : index
      %10 = vector.load %arg5[%c0_8, %c0_9] : memref<1x128xf32, #tpu.memory_space<vmem>>, vector<1x128xf32>
      %11 = vector.shape_cast %10 : vector<1x128xf32> to vector<1x128xf32>
      %12 = vector.broadcast %11 : vector<1x128xf32> to vector<8x128xf32>
      %c0_10 = arith.constant 0 : index
      %c0_11 = arith.constant 0 : index
      %13 = vector.load %arg6[%c0_10, %c0_11] : memref<8x128xf32, #tpu.memory_space<vmem>>, vector<8x128xf32>
      tpu.vector_store %arg6[%c0_10, %c0_11], %12 {strides = array<i32>} : memref<8x128xf32, #tpu.memory_space<vmem>>, vector<8x128xf32>,
    } else {
    }
    %c0 = arith.constant 0 : index
    %c0_1 = arith.constant 0 : index
    %3 = vector.load %arg6[%c0, %c0_1] : memref<8x128xf32, #tpu.memory_space<vmem>>, vector<8x128xf32>
    %c0_2 = arith.constant 0 : index
    %c0_3 = arith.constant 0 : index
    %4 = vector.load %arg3[%c0_2, %c0_3] : memref<8x32xf32, #tpu.memory_space<vmem>>, vector<8x32xf32>
    %5 = arith.truncf %4 : vector<8x32xf32> to vector<8x32xbf16>
    %c0_4 = arith.constant 0 : index
    %c0_5 = arith.constant 0 : index
    %6 = vector.load %arg4[%c0_4, %c0_5] : memref<32x128xbf16, #tpu.memory_space<vmem>>, vector<32x128xbf16>
    %cst = arith.constant dense<0.000000e+00> : vector<8x128xf32>
    %7 = tpu.matmul %5, %6, %cst {dimension_numbers = #tpu.dot_dimension_numbers<[1], [0], [0], [1], [0, 0, 1, 1], [], []>} : vector<8x32xbf16>, vector<32x128xbf16>, vector<8x128xf32> -> vector<8x128xf32>
    %8 = arith.addf %3, %7 : vector<8x128xf32>
    %c0_6 = arith.constant 0 : index
    %c0_7 = arith.constant 0 : index
    %9 = vector.load %arg6[%c0_6, %c0_7] : memref<8x128xf32, #tpu.memory_space<vmem>>, vector<8x128xf32>
    tpu.vector_store %arg6[%c0_6, %c0_7], %8 {strides = array<i32>} : memref<8x128xf32, #tpu.memory_space<vmem>>, vector<8x128xf32>,
    return
  }
  func.func @transform_0(%arg0: i32, %arg1: i32, %arg2: i32) -> (i32, i32) {
    %c0_i32 = arith.constant 0 : i32
    return %arg0, %arg2 : i32, i32
  }
  func.func @transform_1(%arg0: i32, %arg1: i32, %arg2: i32) -> (i32, i32) {
    %c0_i32 = arith.constant 0 : i32
    return %arg2, %arg1 : i32, i32
  }
  func.func @transform_2(%arg0: i32, %arg1: i32, %arg2: i32) -> (i32, i32) {
    %c0_i32 = arith.constant 0 : i32
    %c0_i32_0 = arith.constant 0 : i32
    return %c0_i32, %arg1 : i32, i32
  }
  func.func @transform_3(%arg0: i32, %arg1: i32, %arg2: i32) -> (i32, i32) {
    %c0_i32 = arith.constant 0 : i32
    return %arg0, %arg1 : i32, i32
  }
}

</mosaic_0001>

<llo_original>
// kernel: tpu_custom_call.1
$region0: #{tpu_custom_call.1}
  #allocation0 [shape = 'u32[]', space=smem, size = 0x4, offset = 0x4, fixed_abs, tag = 'smem constant byte address 0x4 - core index']
  #allocation1 [shape = 'u32[144,128]{1,0:T(1,128)}', space=vmem, size = 0x12000, scoped, tag = 'internal scratch']
  %s0 = inlined_call_operand.hbm [shape: f32[8,32], index: 0, kind: input, shape index: {}]
  %s1 = inlined_call_operand.hbm [shape: bf16[32,128], index: 1, kind: input, shape index: {}]
  %s2 = inlined_call_operand.vmem [shape: f32[1,128], index: 2, kind: input, shape index: {}]
  %s3 = inlined_call_operand.hbm [shape: f32[8,128], index: 3, kind: output, shape index: {}]
  %s4 = sld [smem:[#allocation0]]
  $region34: #{tpu_custom_call.1} parent=0
    _
  %s6 = ssub.s32 1, %s4
  %s7 = scalar_select 0, %s6, %s4
  $region1: #{tpu_custom_call.1} parent=0
    #allocation2 [shape = 'u8[4096]{0}', space=vmem, size = 0x1000, scoped, tag = 'input window, operand 0, single buffered']
    #allocation3 [shape = 's32[1]{0}', space=sflag, size = 0x4, scoped, tag = 'scoped memory for tpu_custom_call.1']
    #allocation4 [shape = 's32[1]{0}', space=sflag, size = 0x4, scoped, tag = 'scoped memory for tpu_custom_call.1']
    #allocation5 [shape = 'u8[8192]{0}', space=vmem, size = 0x2000, scoped, tag = 'input window, operand 1, single buffered']
    #allocation6 [shape = 's32[1]{0}', space=sflag, size = 0x4, scoped, tag = 'scoped memory for tpu_custom_call.1']
    #allocation7 [shape = 'u8[4096]{0}', space=vmem, size = 0x1000, scoped, tag = 'output window, operand 0, single buffered']
    %8 = vsyncpa [#allocation3], 0
    %9 = vsyncpa [#allocation6], 0
    %10 = vsyncpa [#allocation4], 0
    // Predicated region
    $region2: #{tpu_custom_call.1} parent=1 // pred_check
      _
    $region3: #{tpu_custom_call.1} parent=1 // pred_check_branch
      %12 = sbr.rel (0) target = $region5
    $region4: #{tpu_custom_call.1} parent=1 // pred_region
      %s14 = ssub.s32 128, 128
      %15 = vsyncadd [#allocation3], %s14
      %s17 = sshll.u32 [#allocation2], 4
      %s18 = int_to_ptr.vmem [resolvable:$true] %s17
      %20 = dma.hbm_to_vmem [thread:$0]  %s0, 128, %s18, [#allocation3]
    $region5: #{tpu_custom_call.1} parent=1 // pred_fallthru
      _
    // Predicated region
    $region6: #{tpu_custom_call.1} parent=1 // pred_check
      _
    $region7: #{tpu_custom_call.1} parent=1 // pred_check_branch
      %22 = sbr.rel (0) target = $region9
    $region8: #{tpu_custom_call.1} parent=1 // pred_region
      %s24 = ssub.s32 256, 256
      %25 = vsyncadd [#allocation6], %s24
      %s26 = sshll.u32 [#allocation5], 4
      %s27 = int_to_ptr.vmem [resolvable:$true] %s26
      %32 = dma.hbm_to_vmem [thread:$0]  %s1, 256, %s27, [#allocation6], 64, 64, 4
    $region9: #{tpu_custom_call.1} parent=1 // pred_fallthru
      _
    // Predicated region
    $region10: #{tpu_custom_call.1} parent=1 // pred_check
      _
    $region11: #{tpu_custom_call.1} parent=1 // pred_check_branch
      %34 = sbr.rel (0) target = $region13
    $region12: #{tpu_custom_call.1} parent=1 // pred_region
      _
    $region13: #{tpu_custom_call.1} parent=1 // pred_fallthru
      _
    // Predicated region
    $region14: #{tpu_custom_call.1} parent=1 // pred_check
      _
    $region15: #{tpu_custom_call.1} parent=1 // pred_check_branch
      %36 = sbr.rel (0) target = $region17
    $region16: #{tpu_custom_call.1} parent=1 // pred_region
      %37 = dma.done [#allocation3], 128
    $region17: #{tpu_custom_call.1} parent=1 // pred_fallthru
      _
    // Predicated region
    $region18: #{tpu_custom_call.1} parent=1 // pred_check
      _
    $region19: #{tpu_custom_call.1} parent=1 // pred_check_branch
      %39 = sbr.rel (0) target = $region21
    $region20: #{tpu_custom_call.1} parent=1 // pred_region
      %40 = dma.done [#allocation6], 256
    $region21: #{tpu_custom_call.1} parent=1 // pred_fallthru
      _
    %p42 = scmp.eq.s32.totalorder 0, 0
    // Predicated region
    $region22: #{tpu_custom_call.1} parent=1 // pred_check
      %p43 = pneg %p42
    $region23: #{tpu_custom_call.1} parent=1 // pred_check_branch
      %45 = sbr.rel (%p43) target = $region25
    $region24: #{tpu_custom_call.1} parent=1 // pred_region
      %v46 = vld [vmem:[%s2] sm:$0x1]
      %v48 = vlaneseq
      %v49 = vshrl.u32 %v48, 7
      %v50 = vsub.s32 0, %v49
      %v51 = vrot.slane %v46, %v50
      %53 = vst [vmem:[#allocation7] sm:$0xff] %v51
    $region25: #{tpu_custom_call.1} parent=1 // pred_fallthru
      _
    %v54 = vld [vmem:[#allocation7] sm:$0xff]
    %v55 = vld [vmem:[#allocation2] sm:$0xff]
    %v56 = vpack.c.bf16 %v55, %v55
    %v57 = vld [vmem:[#allocation5] sm:$0xf]
    %v58 = vld [vmem:[#allocation5 + $0x4] sm:$0xf]
    %v59 = vld [vmem:[#allocation5 + $0x8] sm:$0xf]
    %v60 = vld [vmem:[#allocation5 + $0xc] sm:$0xf]
    %v65 = vunpack.c.l.b16 %v57
    %v66 = vunpack.c.l.b16 %v58
    %v67 = vunpack.c.l.b16 %v59
    %v68 = vunpack.c.l.b16 %v60
    %v69 = vpack.c.b16 %v66, %v65
    %v70 = vpack.c.b16 %v68, %v67
    %vm73 = vcmask 261120
    %v75 = vsel %vm73, %v56, 0
    %77 = vmatprep.subr.bf16.mxu0 0
    %78 = vmatpush1.bf16.msra.mxu0 %v69
    %79 = vmatprep.subr.bf16.mxu0 0
    %80 = vmatpush1.bf16.msra.mxu0 %v70
    %81 = vmatprep.subr.bf16.mxu0 0
    %82 = vmatpush1.bf16.msra.mxu0 0
    %83 = vmatprep.subr.bf16.mxu0 0
    %84 = vmatpush1.bf16.msra.mxu0 0
    %85 = vmatprep.subr.bf16.mxu0 0
    %86 = vmatpush1.bf16.msra.mxu0 0
    %87 = vmatprep.subr.bf16.mxu0 0
    %88 = vmatpush1.bf16.msra.mxu0 0
    %89 = vmatprep.subr.bf16.mxu0 0
    %90 = vmatpush1.bf16.msra.mxu0 0
    %91 = vmatprep.subr.bf16.mxu0 0
    %92 = vmatpush1.bf16.msra.mxu0 0
    %93 = vmatprep.subr.bf16.mxu0 0
    %94 = vmatpush1.bf16.msra.mxu0 0
    %95 = vmatprep.subr.bf16.mxu0 0
    %96 = vmatpush1.bf16.msra.mxu0 0
    %97 = vmatprep.subr.bf16.mxu0 0
    %98 = vmatpush1.bf16.msra.mxu0 0
    %99 = vmatprep.subr.bf16.mxu0 0
    %100 = vmatpush1.bf16.msra.mxu0 0
    %101 = vmatprep.subr.bf16.mxu0 0
    %102 = vmatpush1.bf16.msra.mxu0 0
    %103 = vmatprep.subr.bf16.mxu0 0
    %104 = vmatpush1.bf16.msra.mxu0 0
    %105 = vmatprep.subr.bf16.mxu0 0
    %106 = vmatpush1.bf16.msra.mxu0 0
    %107 = vmatprep.subr.bf16.mxu0 0
    %108 = vmatpush1.bf16.msra.mxu0 0
    %109 = vmatprep.mubr.bf16.mxu0 0
    %110 = vmatmul.mubr.bf16.gmra.mrb[0].mxu0 %v75
    %v111 = vpop.f32.mrb[0].mxu0
    %v112 = vadd.f32 0.0, %v111
    %v113 = vpop.f32.mrb[0].mxu0
    %v114 = vpop.f32.mrb[0].mxu0
    %v115 = vpop.f32.mrb[0].mxu0
    %116 = vdwg.mxu0
    %v117 = vadd.f32 %v54, %v112
    %118 = vst [vmem:[#allocation7] sm:$0xff] %v117
    // Predicated region
    $region26: #{tpu_custom_call.1} parent=1 // pred_check
      _
    $region27: #{tpu_custom_call.1} parent=1 // pred_check_branch
      %120 = sbr.rel (0) target = $region29
    $region28: #{tpu_custom_call.1} parent=1 // pred_region
      %s122 = ssub.s32 128, 128
      %123 = vsyncadd [#allocation4], %s122
      %s125 = sshll.u32 [#allocation7], 4
      %s126 = int_to_ptr.vmem [resolvable:$true] %s125
      %128 = dma.vmem_to_hbm [thread:$0]  %s126, 128, %s3, [#allocation4]
    $region29: #{tpu_custom_call.1} parent=1 // pred_fallthru
      _
    // Predicated region
    $region30: #{tpu_custom_call.1} parent=1 // pred_check
      _
    $region31: #{tpu_custom_call.1} parent=1 // pred_check_branch
      %130 = sbr.rel (0) target = $region33
    $region32: #{tpu_custom_call.1} parent=1 // pred_region
      %131 = dma.done [#allocation4], 128
    $region33: #{tpu_custom_call.1} parent=1 // pred_fallthru
      _
    %132 = vsyncpa [#allocation3], 1
    %133 = vsyncpa [#allocation6], 1
    %134 = vsyncpa [#allocation4], 1

</llo_original>
